<compile_context>
chip_gen: v7x
topology: tpu7x:2x2x1
jax: 0.10.0
libtpu: 0.0.40
codegen_flags: <defaults>
</compile_context>

<pallas_src>
import functools
import math

import jax
import jax.numpy as jnp
from jax.experimental import pallas as pl
from jax.experimental.pallas import tpu as pltpu

SIGMA = 0.1

_MAX_TILE_ROWS = 512                 # 512 rows * 512 lanes * 4 B = 1 MiB per f32 block
_LANE_CHOICES = (512, 1024, 256)     # keep half-width >= 128 -> lane-aligned sub-stores
_VMEM_LIMIT_BYTES = 32 * 1024 * 1024


def _fmix32(x):
    """murmur3 32-bit finalizer (full avalanche), uint32 in/out."""
    x = x ^ (x >> jnp.uint32(16))
    x = x * jnp.uint32(0x85EBCA6B)
    x = x ^ (x >> jnp.uint32(13))
    x = x * jnp.uint32(0xC2B2AE35)
    x = x ^ (x >> jnp.uint32(16))
    return x


def _gaussian_noise_kernel(seed_ref, x_ref, o_ref, *, sigma):
    rows, lanes = x_ref.shape          # static block shape
    half = lanes // 2

    # Counter-based RNG: ONE hash per output pair.  The counter depends only on
    # (seed, global pair index) -> identical noise regardless of tiling / core.
    sd = seed_ref[0].astype(jnp.uint32) * jnp.uint32(0x9E3779B9)
    base = pl.program_id(0) * (rows * half)          # scalar global pair offset

    row = jax.lax.broadcasted_iota(jnp.int32, (rows, half), 0)
    col = jax.lax.broadcasted_iota(jnp.int32, (rows, half), 1)
    # int32 arithmetic wraps only beyond ~2^31 pairs; irrelevant at these sizes.
    pair = (base + row * half + col).astype(jnp.uint32)
    h = _fmix32(pair ^ sd)

    # 16-bit uniforms from one 32-bit hash word.
    inv16 = jnp.float32(1.0 / (1 << 16))
    hi = (h >> jnp.uint32(16)).astype(jnp.int32).astype(jnp.float32)
    lo = (h & jnp.uint32(0xFFFF)).astype(jnp.int32).astype(jnp.float32)
    u1 = jnp.float32(1.0) - hi * inv16               # (0, 1] -> log(u1) finite
    u2 = lo * inv16                                  # [0, 1)

    # Box-Muller, both branches: one (log, sqrt, cos, sin) per TWO outputs.
    # TODO(synk): if a v7x bundle dump shows the VALU slot saturated by the
    # sin/cos/log polynomial expansions, swap in a transcendental-free
    # inverse-CDF approximation; on v5e/v6e this work hides under HBM.
    r = jnp.sqrt(jnp.float32(-2.0) * jnp.log(u1))
    t = jnp.float32(2.0 * math.pi) * u2
    sig = jnp.float32(sigma)

    # Store the two halves directly (half >= 128 -> unmasked vst), no concat
    # temporary.  Add runs at the native dtype width (bf16 on v6e/v7x inputs).
    o_ref[:, :half] = x_ref[:, :half] + (sig * r * jnp.cos(t)).astype(o_ref.dtype)
    o_ref[:, half:] = x_ref[:, half:] + (sig * r * jnp.sin(t)).astype(o_ref.dtype)


def gaussian_noise(x, seed: int, sigma: float = SIGMA, training: bool = True):
    """Pallas equivalent of LambdaModule wrapping the GaussianNoise lambda (NCHW input)."""
    if not training:
        return x

    orig_shape = x.shape
    n = x.size

    # Pick a lane width dividing n so the flat reshape is a free bitcast
    # (no pad / slice -> no extra HBM passes for the common case).
    lanes = None
    for cand in _LANE_CHOICES:
        if n % cand == 0:
            lanes = cand
            break

    flat = x.reshape(-1)
    padded = False
    if lanes is None:
        # TODO(synk): rare ragged case (n not a multiple of 256) still pays a
        # pad + slice HBM pass; a masked in-kernel tail store would remove it.
        lanes = 512
        rows = pl.cdiv(n, lanes)
        flat = jnp.pad(flat, (0, rows * lanes - n))
        padded = True
    rows = flat.size // lanes
    x2d = flat.reshape(rows, lanes)

    # Tile selection:
    #  * ~1-2 MiB blocks to amortize per-grid-step overhead,
    #  * >= 2 grid steps when possible so v7x shards over both TensorCores,
    #  * tile_rows a multiple of 8 (sublane tiling) or the full row count.
    target = min(_MAX_TILE_ROWS, pl.cdiv(rows, 2))
    tile_rows = ((target + 7) // 8) * 8
    if tile_rows >= rows:
        tile_rows = rows
    grid = (pl.cdiv(rows, tile_rows),)

    seed_arr = jnp.array([seed], dtype=jnp.int32)

    out2d = pl.pallas_call(
        functools.partial(_gaussian_noise_kernel, sigma=sigma),
        grid=grid,
        out_shape=jax.ShapeDtypeStruct(x2d.shape, x.dtype),
        in_specs=[
            pl.BlockSpec(memory_space=pltpu.MemorySpace.SMEM),     # seed scalar
            pl.BlockSpec((tile_rows, lanes), lambda i: (i, 0)),    # x tile
        ],
        out_specs=pl.BlockSpec((tile_rows, lanes), lambda i: (i, 0)),
        compiler_params=pltpu.CompilerParams(
            dimension_semantics=("parallel",),
            vmem_limit_bytes=_VMEM_LIMIT_BYTES,
        ),
    )(seed_arr, x2d)

    out = out2d.reshape(-1)
    if padded:
        out = out[:n]
    return out.reshape(orig_shape)


if __name__ == "__main__":
    key = jax.random.PRNGKey(0)
    # NCHW input, consistent with conv-style usage in ntvit.py
    x = jax.random.normal(key, (2, 4, 16, 16), dtype=jnp.float32)

    # Training mode: x + sigma * N(0, 1)
    y = jax.block_until_ready(gaussian_noise(x, seed=1234, sigma=SIGMA, training=True))
    assert y.shape == x.shape and y.dtype == x.dtype
    assert bool(jnp.all(jnp.isfinite(y)))

    noise = y - x
    noise_std = float(jnp.std(noise))
    noise_mean = float(jnp.mean(noise))
    # 2048 samples of N(0, 0.1^2): tight enough to catch halved-variance bugs.
    assert 0.08 < noise_std < 0.12, f"unexpected noise std {noise_std}"
    assert abs(noise_mean) < 0.02, f"unexpected noise mean {noise_mean}"

    # Different seed -> different noise; same seed -> deterministic.
    y2 = jax.block_until_ready(gaussian_noise(x, seed=999, sigma=SIGMA, training=True))
    assert not bool(jnp.all(y2 == y))
    y_rep = jax.block_until_ready(gaussian_noise(x, seed=1234, sigma=SIGMA, training=True))
    assert bool(jnp.all(y_rep == y))

    # Eval mode: identity.
    y_eval = jax.block_until_ready(gaussian_noise(x, seed=1234, training=False))
    assert bool(jnp.all(y_eval == x))

    print("KERNEL_OK")
</pallas_src>

<mosaic_0001>
module attributes {stable_mosaic.version = 11 : i64} {
  func.func @_gaussian_noise_kernel(%arg0: i32, %arg1: memref<1xi32, #tpu.memory_space<smem>>, %arg2: memref<4x512xf32, #tpu.memory_space<vmem>>, %arg3: memref<4x512xf32, #tpu.memory_space<vmem>>) attributes {dimension_semantics = [#tpu.dimension_semantics<parallel>], iteration_bounds = array<i64: 1>, scalar_prefetch = 0 : i64, scratch_operands = 0 : i64, tpu.core_type = #tpu.core_type<tc>, window_params = [{transform_indices = @transform_0, window_bounds = array<i64: 1>}, {transform_indices = @transform_1, window_bounds = array<i64: 4, 512>}, {transform_indices = @transform_2, window_bounds = array<i64: 4, 512>}]} {
    %c0 = arith.constant 0 : index
    %0 = memref.load %arg1[%c0] : memref<1xi32, #tpu.memory_space<smem>>
    %c-1640531527_i32 = arith.constant -1640531527 : i32
    %1 = arith.muli %0, %c-1640531527_i32 : i32
    %c1024_i32 = arith.constant 1024 : i32
    %2 = arith.muli %arg0, %c1024_i32 : i32
    %3 = tpu.iota {dimensions = array<i32: 0>} : vector<4x256xi32>
    %4 = tpu.iota {dimensions = array<i32: 1>} : vector<4x256xi32>
    %c256_i32 = arith.constant 256 : i32
    %5 = vector.broadcast %c256_i32 : i32 to vector<4x256xi32>
    %6 = arith.muli %3, %5 : vector<4x256xi32>
    %7 = vector.broadcast %2 : i32 to vector<4x256xi32>
    %8 = arith.addi %7, %6 : vector<4x256xi32>
    %9 = arith.addi %8, %4 : vector<4x256xi32>
    %10 = vector.broadcast %1 : i32 to vector<4x256xi32>
    %11 = arith.xori %9, %10 : vector<4x256xi32>
    %c16_i32 = arith.constant 16 : i32
    %12 = vector.broadcast %c16_i32 : i32 to vector<4x256xi32>
    %13 = arith.shrui %11, %12 : vector<4x256xi32>
    %14 = arith.xori %11, %13 : vector<4x256xi32>
    %c-2048144789_i32 = arith.constant -2048144789 : i32
    %15 = vector.broadcast %c-2048144789_i32 : i32 to vector<4x256xi32>
    %16 = arith.muli %14, %15 : vector<4x256xi32>
    %c13_i32 = arith.constant 13 : i32
    %17 = vector.broadcast %c13_i32 : i32 to vector<4x256xi32>
    %18 = arith.shrui %16, %17 : vector<4x256xi32>
    %19 = arith.xori %16, %18 : vector<4x256xi32>
    %c-1028477387_i32 = arith.constant -1028477387 : i32
    %20 = vector.broadcast %c-1028477387_i32 : i32 to vector<4x256xi32>
    %21 = arith.muli %19, %20 : vector<4x256xi32>
    %c16_i32_0 = arith.constant 16 : i32
    %22 = vector.broadcast %c16_i32_0 : i32 to vector<4x256xi32>
    %23 = arith.shrui %21, %22 : vector<4x256xi32>
    %24 = arith.xori %21, %23 : vector<4x256xi32>
    %c16_i32_1 = arith.constant 16 : i32
    %25 = vector.broadcast %c16_i32_1 : i32 to vector<4x256xi32>
    %26 = arith.shrui %24, %25 : vector<4x256xi32>
    %27 = arith.sitofp %26 : vector<4x256xi32> to vector<4x256xf32>
    %c65535_i32 = arith.constant 65535 : i32
    %28 = vector.broadcast %c65535_i32 : i32 to vector<4x256xi32>
    %29 = arith.andi %24, %28 : vector<4x256xi32>
    %30 = arith.sitofp %29 : vector<4x256xi32> to vector<4x256xf32>
    %cst = arith.constant 1.52587891E-5 : f32
    %31 = vector.broadcast %cst : f32 to vector<4x256xf32>
    %32 = arith.mulf %27, %31 : vector<4x256xf32>
    %cst_2 = arith.constant 1.000000e+00 : f32
    %33 = vector.broadcast %cst_2 : f32 to vector<4x256xf32>
    %34 = arith.subf %33, %32 : vector<4x256xf32>
    %cst_3 = arith.constant 1.52587891E-5 : f32
    %35 = vector.broadcast %cst_3 : f32 to vector<4x256xf32>
    %36 = arith.mulf %30, %35 : vector<4x256xf32>
    %37 = math.log %34 : vector<4x256xf32>
    %cst_4 = arith.constant -2.000000e+00 : f32
    %38 = vector.broadcast %cst_4 : f32 to vector<4x256xf32>
    %39 = arith.mulf %38, %37 : vector<4x256xf32>
    %40 = math.sqrt %39 : vector<4x256xf32>
    %cst_5 = arith.constant 6.28318548 : f32
    %41 = vector.broadcast %cst_5 : f32 to vector<4x256xf32>
    %42 = arith.mulf %41, %36 : vector<4x256xf32>
    %c0_6 = arith.constant 0 : index
    %c0_7 = arith.constant 0 : index
    %43 = vector.load %arg2[%c0_6, %c0_7] : memref<4x512xf32, #tpu.memory_space<vmem>>, vector<4x256xf32>
    %cst_8 = arith.constant 1.000000e-01 : f32
    %44 = vector.broadcast %cst_8 : f32 to vector<4x256xf32>
    %45 = arith.mulf %44, %40 : vector<4x256xf32>
    %46 = math.cos %42 : vector<4x256xf32>
    %47 = arith.mulf %45, %46 : vector<4x256xf32>
    %48 = arith.addf %43, %47 : vector<4x256xf32>
    %c0_9 = arith.constant 0 : index
    %c0_10 = arith.constant 0 : index
    %49 = vector.load %arg3[%c0_9, %c0_10] : memref<4x512xf32, #tpu.memory_space<vmem>>, vector<4x256xf32>
    tpu.vector_store %arg3[%c0_9, %c0_10], %48 {strides = array<i32>} : memref<4x512xf32, #tpu.memory_space<vmem>>, vector<4x256xf32>,
    %c0_11 = arith.constant 0 : index
    %c256 = arith.constant 256 : index
    %50 = vector.load %arg2[%c0_11, %c256] : memref<4x512xf32, #tpu.memory_space<vmem>>, vector<4x256xf32>
    %cst_12 = arith.constant 1.000000e-01 : f32
    %51 = vector.broadcast %cst_12 : f32 to vector<4x256xf32>
    %52 = arith.mulf %51, %40 : vector<4x256xf32>
    %53 = math.sin %42 : vector<4x256xf32>
    %54 = arith.mulf %52, %53 : vector<4x256xf32>
    %55 = arith.addf %50, %54 : vector<4x256xf32>
    %c0_13 = arith.constant 0 : index
    %c256_14 = arith.constant 256 : index
    %56 = vector.load %arg3[%c0_13, %c256_14] : memref<4x512xf32, #tpu.memory_space<vmem>>, vector<4x256xf32>
    tpu.vector_store %arg3[%c0_13, %c256_14], %55 {strides = array<i32>} : memref<4x512xf32, #tpu.memory_space<vmem>>, vector<4x256xf32>,
    return
  }
  func.func @transform_0(%arg0: i32) -> i32 {
    %c0_i32 = arith.constant 0 : i32
    %c0_i32_0 = arith.constant 0 : i32
    return %c0_i32 : i32
  }
  func.func @transform_1(%arg0: i32) -> (i32, i32) {
    %c0_i32 = arith.constant 0 : i32
    %c0_i32_0 = arith.constant 0 : i32
    return %arg0, %c0_i32 : i32, i32
  }
  func.func @transform_2(%arg0: i32) -> (i32, i32) {
    %c0_i32 = arith.constant 0 : i32
    %c0_i32_0 = arith.constant 0 : i32
    return %arg0, %c0_i32 : i32, i32
  }
}

</mosaic_0001>

<llo_original>
// kernel: tpu_custom_call.1
$region0: #{tpu_custom_call.1}
  #allocation0 [shape = 'u32[]', space=smem, size = 0x4, offset = 0x4, fixed_abs, tag = 'smem constant byte address 0x4 - core index']
  #allocation1 [shape = 'u32[144,128]{1,0:T(1,128)}', space=vmem, size = 0x12000, scoped, tag = 'internal scratch']
  #allocation2 [shape = 's32[1]{0:T(128)S(6)}', space=smem, size = 0x200, scoped, tag = 'scoped memory for tpu_custom_call.1']
  %s0 = inlined_call_operand.<no memory space> [shape: s32[1], index: 0, kind: input, shape index: {}]
  %s1 = inlined_call_operand.hbm [shape: f32[4,512], index: 1, kind: input, shape index: {}]
  %s2 = inlined_call_operand.hbm [shape: f32[4,512], index: 2, kind: output, shape index: {}]
  %s3 = sld [smem:[#allocation0]]
  $region22: #{tpu_custom_call.1} parent=0
    _
  %s5 = ssub.s32 1, %s3
  %s6 = scalar_select 0, %s5, %s3
  %7 = sst [smem:[#allocation2]] %s0
  $region1: #{tpu_custom_call.1} parent=0
    #allocation3 [shape = 'u8[8192]{0}', space=vmem, size = 0x2000, scoped, tag = 'input window, operand 1, single buffered']
    #allocation4 [shape = 's32[1]{0}', space=sflag, size = 0x4, scoped, tag = 'scoped memory for tpu_custom_call.1']
    #allocation5 [shape = 's32[1]{0}', space=sflag, size = 0x4, scoped, tag = 'scoped memory for tpu_custom_call.1']
    #allocation6 [shape = 'u8[8192]{0}', space=vmem, size = 0x2000, scoped, tag = 'output window, operand 0, single buffered']
    %8 = vsyncpa [#allocation4], 0
    %9 = vsyncpa [#allocation5], 0
    // Predicated region
    $region2: #{tpu_custom_call.1} parent=1 // pred_check
      _
    $region3: #{tpu_custom_call.1} parent=1 // pred_check_branch
      %11 = sbr.rel (0) target = $region5
    $region4: #{tpu_custom_call.1} parent=1 // pred_region
      _
    $region5: #{tpu_custom_call.1} parent=1 // pred_fallthru
      _
    // Predicated region
    $region6: #{tpu_custom_call.1} parent=1 // pred_check
      _
    $region7: #{tpu_custom_call.1} parent=1 // pred_check_branch
      %13 = sbr.rel (0) target = $region9
    $region8: #{tpu_custom_call.1} parent=1 // pred_region
      %s15 = ssub.s32 256, 256
      %16 = vsyncadd [#allocation4], %s15
      %s18 = sshll.u32 [#allocation3], 4
      %s19 = int_to_ptr.vmem [resolvable:$true] %s18
      %21 = dma.hbm_to_vmem [thread:$0]  %s1, 256, %s19, [#allocation4]
    $region9: #{tpu_custom_call.1} parent=1 // pred_fallthru
      _
    // Predicated region
    $region10: #{tpu_custom_call.1} parent=1 // pred_check
      _
    $region11: #{tpu_custom_call.1} parent=1 // pred_check_branch
      %23 = sbr.rel (0) target = $region13
    $region12: #{tpu_custom_call.1} parent=1 // pred_region
      %24 = dma.done [#allocation4], 256
    $region13: #{tpu_custom_call.1} parent=1 // pred_fallthru
      _
    %s25 = sld [smem:[#allocation2]]
    %s26 = smul.u32 %s25, 2654435769
    %s27 = smul.u32 0, 1024
    %v28 = vlaneseq
    %v29 = vshrl.u32 %v28, 7
    %v30 = vlaneseq
    %v31 = vand.u32 %v30, 127
    %v32 = vadd.s32 %v31, 128
    %v33 = vmul.u32 %v29, 256
    %v34 = vstv %s27
    %v35 = vadd.s32 %v34, %v33
    %v36 = vadd.s32 %v35, %v31
    %v37 = vadd.s32 %v35, %v32
    %v38 = vstv %s26
    %v39 = vxor.u32 %v36, %v38
    %v40 = vxor.u32 %v37, %v38
    %v41 = vshrl.u32 %v39, 16
    %v42 = vshrl.u32 %v40, 16
    %v43 = vxor.u32 %v39, %v41
    %v44 = vxor.u32 %v40, %v42
    %v45 = vmul.u32 %v43, 2246822507
    %v46 = vmul.u32 %v44, 2246822507
    %v47 = vshrl.u32 %v45, 13
    %v48 = vshrl.u32 %v46, 13
    %v49 = vxor.u32 %v45, %v47
    %v50 = vxor.u32 %v46, %v48
    %v51 = vmul.u32 %v49, 3266489909
    %v52 = vmul.u32 %v50, 3266489909
    %v53 = vshrl.u32 %v51, 16
    %v54 = vshrl.u32 %v52, 16
    %v55 = vxor.u32 %v51, %v53
    %v56 = vxor.u32 %v52, %v54
    %v57 = vshrl.u32 %v55, 16
    %v58 = vshrl.u32 %v56, 16
    %v59 = vcvt.s32.f32 %v57
    %v60 = vcvt.s32.f32 %v58
    %v61 = vand.u32 %v55, 65535
    %v62 = vand.u32 %v56, 65535
    %v63 = vcvt.s32.f32 %v61
    %v64 = vcvt.s32.f32 %v62
    %v65 = vmul.f32 %v59, 1.5258789e-05
    %v66 = vmul.f32 %v60, 1.5258789e-05
    %v67 = vsub.f32 1.0, %v65
    %v68 = vsub.f32 1.0, %v66
    %v69 = vmul.f32 %v63, 1.5258789e-05
    %v70 = vmul.f32 %v64, 1.5258789e-05
    %v71 = vlog2.pop %v67
    %v72 = vmul.f32 %v71, 0.6931472
    %v73 = vlog2.pop %v68
    %v74 = vmul.f32 %v73, 0.6931472
    %v75 = vmul.f32 %v72, -2.0
    %v76 = vmul.f32 %v74, -2.0
    %v77 = vrsqrt.pop %v75
    %v78 = vmul.f32 %v75, %v77
    %vm79 = vcmp.eq.f32.partialorder %v75, inf
    %v80 = vsel %vm79, %v75, %v78
    %vm81 = vcmp.eq.f32.partialorder %v75, 0.0
    %v82 = vand.u32 %v75, 2147483648
    %v83 = vsel %vm81, %v82, %v80
    %v84 = vrsqrt.pop %v76
    %v85 = vmul.f32 %v76, %v84
    %vm86 = vcmp.eq.f32.partialorder %v76, inf
    %v87 = vsel %vm86, %v76, %v85
    %vm88 = vcmp.eq.f32.partialorder %v76, 0.0
    %v89 = vand.u32 %v76, 2147483648
    %v90 = vsel %vm88, %v89, %v87
    %v91 = vmul.f32 %v69, 6.2831855
    %v92 = vmul.f32 %v70, 6.2831855
    %v93 = vld [vmem:[#allocation3] sm:$0xff]
    %v94 = vmul.f32 %v83, 0.1
    %v95 = vmul.f32 %v90, 0.1
    %v96 = vand.u32 2147483647, %v91
    %vm97 = vcmp.le.f32.partialorder %v96, 0.7853982
    %vm98 = vcmp.lt.s32.totalorder %v91, 0
    %v99 = vand.u32 %v91, 2139095040
    %v100 = vshrl.u32 %v99, 23
    %v101 = vsub.s32 %v100, 127
    %v102 = vand.u32 2147483647, %v91
    %v103 = vand.u32 %v102, 8388607
    %v104 = vor.u32 %v103, 8388608
    %v105 = vsub.s32 0, %v104
    %v106 = vadd.s32 %v101, 1
    %vm107 = vcmp.gt.s32.totalorder %v106, 0
    %v108 = vsel %vm107, %v106, 0
    %v109 = vshrl.u32 %v108, 5
    %v110 = vand.u32 %v108, 31
    %v111 = vsub.s32 32, %v110
    %v112 = vshrl.u32 683565275, %v111
    %v113 = vshll.u32 683565275, %v110
    %v114 = vshrl.u32 2475754826, %v111
    %v115 = vor.u32 %v113, %v114
    %v116 = vshll.u32 2475754826, %v110
    %v117 = vshrl.u32 2131351028, %v111
    %v118 = vor.u32 %v116, %v117
    %v119 = vshll.u32 2131351028, %v110
    %v120 = vshrl.u32 2102212464, %v111
    %v121 = vor.u32 %v119, %v120
    %v122 = vshll.u32 2102212464, %v110
    %v123 = vshrl.u32 920167782, %v111
    %v124 = vor.u32 %v122, %v123
    %v125 = vshll.u32 920167782, %v110
    %v126 = vshrl.u32 1326507024, %v111
    %v127 = vor.u32 %v125, %v126
    %vm128 = vcmp.lt.s32.totalorder %v109, 1
    %vm129 = vcmp.lt.s32.totalorder %v109, 2
    %vm130 = vcmp.lt.s32.totalorder %v109, 3
    %vm131 = vcmp.lt.s32.totalorder %v109, 4
    %v132 = vsel %vm128, %v112, %v115
    %v133 = vsel %vm131, %v121, 2102212464
    %v134 = vsel %vm130, %v118, %v133
    %v135 = vsel %vm129, %v132, %v134
    %v136 = vsel %vm128, %v115, %v118
    %v137 = vsel %vm131, %v124, 920167782
    %v138 = vsel %vm130, %v121, %v137
    %v139 = vsel %vm129, %v136, %v138
    %v140 = vsel %vm128, %v118, %v121
    %v141 = vsel %vm131, %v127, 1326507024
    %v142 = vsel %vm130, %v124, %v141
    %v143 = vsel %vm129, %v140, %v142
    %v144 = vshll.u32 %v104, 8
    %v145 = vmul.u32.u64.compose %v144, %v143
    %v146 = vextract.low.u32 %v145
    %v147 = vextract.high.u32 %v145
    %v148 = vmul.u32.u64.compose %v144, %v139
    %v149 = vextract.low.u32 %v148
    %v150 = vextract.high.u32 %v148
    %v151 = vmul.u32 %v144, %v135
    %v152 = vadd.s32 %v147, %v149
    %vm153 = vc.u32 %v147, %v149
    %v154 = vadd.s32 %v150, 1
    %v155 = vsel %vm153, %v154, %v150
    %v156 = vadd.s32 %v151, %v155
    %v157 = vadd.s32 %v156, 536870912
    %v158 = vshrl.u32 %v157, 30
    %v159 = vshll.u32 %v158, 30
    %v160 = vsub.s32 %v156, %v159
    %vm161 = vcmp.lt.s32.totalorder %v160, 0
    %v162 = vsub.s32 0, %v160
    %v163 = vsel %vm161, %v162, %v160
    %v164 = vclz %v163
    %v165 = vsub.s32 %v164, 2
    %vm166 = vcmp.gt.s32.totalorder 0, %v165
    %v167 = vsel %vm166, 0, %v165
    %v168 = vsub.s32 32, %v167
    %v169 = vshll.u32 %v160, %v167
    %v170 = vshrl.u32 %v152, %v168
    %v171 = vor.u32 %v169, %v170
    %v172 = vsub.s32 4294967266, %v167
    %v173 = vadd.s32 %v172, 127
    %v174 = vshll.u32 %v173, 23
    %v175 = vor.u32 4788187, %v174
    %v176 = vand.u32 2147483647, %v175
    %v178 = vcvt.s32.f32 %v171
    %v179 = vmul.f32 %v178, %v176
    %v180 = vxor.u32 %v179, 2147483648
    %v181 = vsel %vm98, %v180, %v179
    %v182 = vsub.s32 4, %v158
    %v183 = vsel %vm98, %v182, %v158
    %v184 = vsel %vm97, %v91, %v181
    %v185 = vsel %vm97, 0, %v183
    %v186 = vcosq.f32.pop %v184
    %v187 = vsinq.f32.pop %v184
    %vm188 = vweird.f32 %v91
    %v189 = vand.u32 %v185, 3
    %vm190 = vcmp.lt.s32.totalorder %v189, 2
    %vm191 = vcmp.eq.s32.totalorder %v189, 0
    %v192 = vxor.u32 %v187, 2147483648
    %v193 = vsel %vm191, %v186, %v192
    %vm194 = vcmp.eq.s32.totalorder %v189, 2
    %v195 = vxor.u32 %v186, 2147483648
    %v196 = vsel %vm194, %v195, %v187
    %v197 = vsel %vm190, %v193, %v196
    %v198 = vsel %vm188, nan, %v197
    %v199 = vand.u32 2147483647, %v92
    %vm200 = vcmp.le.f32.partialorder %v199, 0.7853982
    %vm201 = vcmp.lt.s32.totalorder %v92, 0
    %v202 = vand.u32 %v92, 2139095040
    %v203 = vshrl.u32 %v202, 23
    %v204 = vsub.s32 %v203, 127
    %v205 = vand.u32 2147483647, %v92
    %v206 = vand.u32 %v205, 8388607
    %v207 = vor.u32 %v206, 8388608
    %v208 = vsub.s32 0, %v207
    %v209 = vadd.s32 %v204, 1
    %vm210 = vcmp.gt.s32.totalorder %v209, 0
    %v211 = vsel %vm210, %v209, 0
    %v212 = vshrl.u32 %v211, 5
    %v213 = vand.u32 %v211, 31
    %v214 = vsub.s32 32, %v213
    %v215 = vshrl.u32 683565275, %v214
    %v216 = vshll.u32 683565275, %v213
    %v217 = vshrl.u32 2475754826, %v214
    %v218 = vor.u32 %v216, %v217
    %v219 = vshll.u32 2475754826, %v213
    %v220 = vshrl.u32 2131351028, %v214
    %v221 = vor.u32 %v219, %v220
    %v222 = vshll.u32 2131351028, %v213
    %v223 = vshrl.u32 2102212464, %v214
    %v224 = vor.u32 %v222, %v223
    %v225 = vshll.u32 2102212464, %v213
    %v226 = vshrl.u32 920167782, %v214
    %v227 = vor.u32 %v225, %v226
    %v228 = vshll.u32 920167782, %v213
    %v229 = vshrl.u32 1326507024, %v214
    %v230 = vor.u32 %v228, %v229
    %vm231 = vcmp.lt.s32.totalorder %v212, 1
    %vm232 = vcmp.lt.s32.totalorder %v212, 2
    %vm233 = vcmp.lt.s32.totalorder %v212, 3
    %vm234 = vcmp.lt.s32.totalorder %v212, 4
    %v235 = vsel %vm231, %v215, %v218
    %v236 = vsel %vm234, %v224, 2102212464
    %v237 = vsel %vm233, %v221, %v236
    %v238 = vsel %vm232, %v235, %v237
    %v239 = vsel %vm231, %v218, %v221
    %v240 = vsel %vm234, %v227, 920167782
    %v241 = vsel %vm233, %v224, %v240
    %v242 = vsel %vm232, %v239, %v241
    %v243 = vsel %vm231, %v221, %v224
    %v244 = vsel %vm234, %v230, 1326507024
    %v245 = vsel %vm233, %v227, %v244
    %v246 = vsel %vm232, %v243, %v245
    %v247 = vshll.u32 %v207, 8
    %v248 = vmul.u32.u64.compose %v247, %v246
    %v249 = vextract.low.u32 %v248
    %v250 = vextract.high.u32 %v248
    %v251 = vmul.u32.u64.compose %v247, %v242
    %v252 = vextract.low.u32 %v251
    %v253 = vextract.high.u32 %v251
    %v254 = vmul.u32 %v247, %v238
    %v255 = vadd.s32 %v250, %v252
    %vm256 = vc.u32 %v250, %v252
    %v257 = vadd.s32 %v253, 1
    %v258 = vsel %vm256, %v257, %v253
    %v259 = vadd.s32 %v254, %v258
    %v260 = vadd.s32 %v259, 536870912
    %v261 = vshrl.u32 %v260, 30
    %v262 = vshll.u32 %v261, 30
    %v263 = vsub.s32 %v259, %v262
    %vm264 = vcmp.lt.s32.totalorder %v263, 0
    %v265 = vsub.s32 0, %v263
    %v266 = vsel %vm264, %v265, %v263
    %v267 = vclz %v266
    %v268 = vsub.s32 %v267, 2
    %vm269 = vcmp.gt.s32.totalorder 0, %v268
    %v270 = vsel %vm269, 0, %v268
    %v271 = vsub.s32 32, %v270
    %v272 = vshll.u32 %v263, %v270
    %v273 = vshrl.u32 %v255, %v271
    %v274 = vor.u32 %v272, %v273
    %v275 = vsub.s32 4294967266, %v270
    %v276 = vadd.s32 %v275, 127
    %v277 = vshll.u32 %v276, 23
    %v278 = vor.u32 4788187, %v277
    %v279 = vand.u32 2147483647, %v278
    %v281 = vcvt.s32.f32 %v274
    %v282 = vmul.f32 %v281, %v279
    %v283 = vxor.u32 %v282, 2147483648
    %v284 = vsel %vm201, %v283, %v282
    %v285 = vsub.s32 4, %v261
    %v286 = vsel %vm201, %v285, %v261
    %v287 = vsel %vm200, %v92, %v284
    %v288 = vsel %vm200, 0, %v286
    %v289 = vcosq.f32.pop %v287
    %v290 = vsinq.f32.pop %v287
    %vm291 = vweird.f32 %v92
    %v292 = vand.u32 %v288, 3
    %vm293 = vcmp.lt.s32.totalorder %v292, 2
    %vm294 = vcmp.eq.s32.totalorder %v292, 0
    %v295 = vxor.u32 %v290, 2147483648
    %v296 = vsel %vm294, %v289, %v295
    %vm297 = vcmp.eq.s32.totalorder %v292, 2
    %v298 = vxor.u32 %v289, 2147483648
    %v299 = vsel %vm297, %v298, %v290
    %v300 = vsel %vm293, %v296, %v299
    %v301 = vsel %vm291, nan, %v300
    %v302 = vmul.f32 %v94, %v198
    %v303 = vmul.f32 %v95, %v301
    %v306 = vcombine.low %v302, %v303
    %v308 = vadd.f32 %v93, %v306
    %309 = vst [vmem:[#allocation6] sm:$0xff] %v308
    %v310 = vld [vmem:[#allocation3 + $0x8] sm:$0xff]
    %v311 = vand.u32 2147483647, %v91
    %vm312 = vcmp.le.f32.partialorder %v311, 0.7853982
    %vm313 = vcmp.lt.s32.totalorder %v91, 0
    %v314 = vand.u32 %v91, 2139095040
    %v315 = vshrl.u32 %v314, 23
    %v316 = vsub.s32 %v315, 127
    %v317 = vand.u32 2147483647, %v91
    %v318 = vand.u32 %v317, 8388607
    %v319 = vor.u32 %v318, 8388608
    %v320 = vsub.s32 0, %v319
    %v321 = vadd.s32 %v316, 1
    %vm322 = vcmp.gt.s32.totalorder %v321, 0
    %v323 = vsel %vm322, %v321, 0
    %v324 = vshrl.u32 %v323, 5
    %v325 = vand.u32 %v323, 31
    %v326 = vsub.s32 32, %v325
    %v327 = vshrl.u32 683565275, %v326
    %v328 = vshll.u32 683565275, %v325
    %v329 = vshrl.u32 2475754826, %v326
    %v330 = vor.u32 %v328, %v329
    %v331 = vshll.u32 2475754826, %v325
    %v332 = vshrl.u32 2131351028, %v326
    %v333 = vor.u32 %v331, %v332
    %v334 = vshll.u32 2131351028, %v325
    %v335 = vshrl.u32 2102212464, %v326
    %v336 = vor.u32 %v334, %v335
    %v337 = vshll.u32 2102212464, %v325
    %v338 = vshrl.u32 920167782, %v326
    %v339 = vor.u32 %v337, %v338
    %v340 = vshll.u32 920167782, %v325
    %v341 = vshrl.u32 1326507024, %v326
    %v342 = vor.u32 %v340, %v341
    %vm343 = vcmp.lt.s32.totalorder %v324, 1
    %vm344 = vcmp.lt.s32.totalorder %v324, 2
    %vm345 = vcmp.lt.s32.totalorder %v324, 3
    %vm346 = vcmp.lt.s32.totalorder %v324, 4
    %v347 = vsel %vm343, %v327, %v330
    %v348 = vsel %vm346, %v336, 2102212464
    %v349 = vsel %vm345, %v333, %v348
    %v350 = vsel %vm344, %v347, %v349
    %v351 = vsel %vm343, %v330, %v333
    %v352 = vsel %vm346, %v339, 920167782
    %v353 = vsel %vm345, %v336, %v352
    %v354 = vsel %vm344, %v351, %v353
    %v355 = vsel %vm343, %v333, %v336
    %v356 = vsel %vm346, %v342, 1326507024
    %v357 = vsel %vm345, %v339, %v356
    %v358 = vsel %vm344, %v355, %v357
    %v359 = vshll.u32 %v319, 8
    %v360 = vmul.u32.u64.compose %v359, %v358
    %v361 = vextract.low.u32 %v360
    %v362 = vextract.high.u32 %v360
    %v363 = vmul.u32.u64.compose %v359, %v354
    %v364 = vextract.low.u32 %v363
    %v365 = vextract.high.u32 %v363
    %v366 = vmul.u32 %v359, %v350
    %v367 = vadd.s32 %v362, %v364
    %vm368 = vc.u32 %v362, %v364
    %v369 = vadd.s32 %v365, 1
    %v370 = vsel %vm368, %v369, %v365
    %v371 = vadd.s32 %v366, %v370
    %v372 = vadd.s32 %v371, 536870912
    %v373 = vshrl.u32 %v372, 30
    %v374 = vshll.u32 %v373, 30
    %v375 = vsub.s32 %v371, %v374
    %vm376 = vcmp.lt.s32.totalorder %v375, 0
    %v377 = vsub.s32 0, %v375
    %v378 = vsel %vm376, %v377, %v375
    %v379 = vclz %v378
    %v380 = vsub.s32 %v379, 2
    %vm381 = vcmp.gt.s32.totalorder 0, %v380
    %v382 = vsel %vm381, 0, %v380
    %v383 = vsub.s32 32, %v382
    %v384 = vshll.u32 %v375, %v382
    %v385 = vshrl.u32 %v367, %v383
    %v386 = vor.u32 %v384, %v385
    %v387 = vsub.s32 4294967266, %v382
    %v388 = vadd.s32 %v387, 127
    %v389 = vshll.u32 %v388, 23
    %v390 = vor.u32 4788187, %v389
    %v391 = vand.u32 2147483647, %v390
    %v393 = vcvt.s32.f32 %v386
    %v394 = vmul.f32 %v393, %v391
    %v395 = vxor.u32 %v394, 2147483648
    %v396 = vsel %vm313, %v395, %v394
    %v397 = vsub.s32 4, %v373
    %v398 = vsel %vm313, %v397, %v373
    %v399 = vsel %vm312, %v91, %v396
    %v400 = vsel %vm312, 0, %v398
    %v401 = vcosq.f32.pop %v399
    %v402 = vsinq.f32.pop %v399
    %vm403 = vweird.f32 %v91
    %v404 = vadd.s32 %v400, 3
    %v405 = vand.u32 %v404, 3
    %vm406 = vcmp.lt.s32.totalorder %v405, 2
    %vm407 = vcmp.eq.s32.totalorder %v405, 0
    %v408 = vxor.u32 %v402, 2147483648
    %v409 = vsel %vm407, %v401, %v408
    %vm410 = vcmp.eq.s32.totalorder %v405, 2
    %v411 = vxor.u32 %v401, 2147483648
    %v412 = vsel %vm410, %v411, %v402
    %v413 = vsel %vm406, %v409, %v412
    %v414 = vsel %vm403, nan, %v413
    %v415 = vand.u32 2147483647, %v92
    %vm416 = vcmp.le.f32.partialorder %v415, 0.7853982
    %vm417 = vcmp.lt.s32.totalorder %v92, 0
    %v418 = vand.u32 %v92, 2139095040
    %v419 = vshrl.u32 %v418, 23
    %v420 = vsub.s32 %v419, 127
    %v421 = vand.u32 2147483647, %v92
    %v422 = vand.u32 %v421, 8388607
    %v423 = vor.u32 %v422, 8388608
    %v424 = vsub.s32 0, %v423
    %v425 = vadd.s32 %v420, 1
    %vm426 = vcmp.gt.s32.totalorder %v425, 0
    %v427 = vsel %vm426, %v425, 0
    %v428 = vshrl.u32 %v427, 5
    %v429 = vand.u32 %v427, 31
    %v430 = vsub.s32 32, %v429
    %v431 = vshrl.u32 683565275, %v430
    %v432 = vshll.u32 683565275, %v429
    %v433 = vshrl.u32 2475754826, %v430
    %v434 = vor.u32 %v432, %v433
    %v435 = vshll.u32 2475754826, %v429
    %v436 = vshrl.u32 2131351028, %v430
    %v437 = vor.u32 %v435, %v436
    %v438 = vshll.u32 2131351028, %v429
    %v439 = vshrl.u32 2102212464, %v430
    %v440 = vor.u32 %v438, %v439
    %v441 = vshll.u32 2102212464, %v429
    %v442 = vshrl.u32 920167782, %v430
    %v443 = vor.u32 %v441, %v442
    %v444 = vshll.u32 920167782, %v429
    %v445 = vshrl.u32 1326507024, %v430
    %v446 = vor.u32 %v444, %v445
    %vm447 = vcmp.lt.s32.totalorder %v428, 1
    %vm448 = vcmp.lt.s32.totalorder %v428, 2
    %vm449 = vcmp.lt.s32.totalorder %v428, 3
    %vm450 = vcmp.lt.s32.totalorder %v428, 4
    %v451 = vsel %vm447, %v431, %v434
    %v452 = vsel %vm450, %v440, 2102212464
    %v453 = vsel %vm449, %v437, %v452
    %v454 = vsel %vm448, %v451, %v453
    %v455 = vsel %vm447, %v434, %v437
    %v456 = vsel %vm450, %v443, 920167782
    %v457 = vsel %vm449, %v440, %v456
    %v458 = vsel %vm448, %v455, %v457
    %v459 = vsel %vm447, %v437, %v440
    %v460 = vsel %vm450, %v446, 1326507024
    %v461 = vsel %vm449, %v443, %v460
    %v462 = vsel %vm448, %v459, %v461
    %v463 = vshll.u32 %v423, 8
    %v464 = vmul.u32.u64.compose %v463, %v462
    %v465 = vextract.low.u32 %v464
    %v466 = vextract.high.u32 %v464
    %v467 = vmul.u32.u64.compose %v463, %v458
    %v468 = vextract.low.u32 %v467
    %v469 = vextract.high.u32 %v467
    %v470 = vmul.u32 %v463, %v454
    %v471 = vadd.s32 %v466, %v468
    %vm472 = vc.u32 %v466, %v468
    %v473 = vadd.s32 %v469, 1
    %v474 = vsel %vm472, %v473, %v469
    %v475 = vadd.s32 %v470, %v474
    %v476 = vadd.s32 %v475, 536870912
    %v477 = vshrl.u32 %v476, 30
    %v478 = vshll.u32 %v477, 30
    %v479 = vsub.s32 %v475, %v478
    %vm480 = vcmp.lt.s32.totalorder %v479, 0
    %v481 = vsub.s32 0, %v479
    %v482 = vsel %vm480, %v481, %v479
    %v483 = vclz %v482
    %v484 = vsub.s32 %v483, 2
    %vm485 = vcmp.gt.s32.totalorder 0, %v484
    %v486 = vsel %vm485, 0, %v484
    %v487 = vsub.s32 32, %v486
    %v488 = vshll.u32 %v479, %v486
    %v489 = vshrl.u32 %v471, %v487
    %v490 = vor.u32 %v488, %v489
    %v491 = vsub.s32 4294967266, %v486
    %v492 = vadd.s32 %v491, 127
    %v493 = vshll.u32 %v492, 23
    %v494 = vor.u32 4788187, %v493
    %v495 = vand.u32 2147483647, %v494
    %v497 = vcvt.s32.f32 %v490
    %v498 = vmul.f32 %v497, %v495
    %v499 = vxor.u32 %v498, 2147483648
    %v500 = vsel %vm417, %v499, %v498
    %v501 = vsub.s32 4, %v477
    %v502 = vsel %vm417, %v501, %v477
    %v503 = vsel %vm416, %v92, %v500
    %v504 = vsel %vm416, 0, %v502
    %v505 = vcosq.f32.pop %v503
    %v506 = vsinq.f32.pop %v503
    %vm507 = vweird.f32 %v92
    %v508 = vadd.s32 %v504, 3
    %v509 = vand.u32 %v508, 3
    %vm510 = vcmp.lt.s32.totalorder %v509, 2
    %vm511 = vcmp.eq.s32.totalorder %v509, 0
    %v512 = vxor.u32 %v506, 2147483648
    %v513 = vsel %vm511, %v505, %v512
    %vm514 = vcmp.eq.s32.totalorder %v509, 2
    %v515 = vxor.u32 %v505, 2147483648
    %v516 = vsel %vm514, %v515, %v506
    %v517 = vsel %vm510, %v513, %v516
    %v518 = vsel %vm507, nan, %v517
    %v519 = vmul.f32 %v94, %v414
    %v520 = vmul.f32 %v95, %v518
    %v523 = vcombine.low %v519, %v520
    %v525 = vadd.f32 %v310, %v523
    %526 = vst [vmem:[#allocation6 + $0x8] sm:$0xff] %v525
    // Predicated region
    $region14: #{tpu_custom_call.1} parent=1 // pred_check
      _
    $region15: #{tpu_custom_call.1} parent=1 // pred_check_branch
      %528 = sbr.rel (0) target = $region17
    $region16: #{tpu_custom_call.1} parent=1 // pred_region
      %s530 = ssub.s32 256, 256
      %531 = vsyncadd [#allocation5], %s530
      %s533 = sshll.u32 [#allocation6], 4
      %s534 = int_to_ptr.vmem [resolvable:$true] %s533
      %536 = dma.vmem_to_hbm [thread:$0]  %s534, 256, %s2, [#allocation5]
    $region17: #{tpu_custom_call.1} parent=1 // pred_fallthru
      _
    // Predicated region
    $region18: #{tpu_custom_call.1} parent=1 // pred_check
      _
    $region19: #{tpu_custom_call.1} parent=1 // pred_check_branch
      %538 = sbr.rel (0) target = $region21
    $region20: #{tpu_custom_call.1} parent=1 // pred_region
      %539 = dma.done [#allocation5], 256
    $region21: #{tpu_custom_call.1} parent=1 // pred_fallthru
      _
    %540 = vsyncpa [#allocation4], 1
    %541 = vsyncpa [#allocation5], 1

</llo_original>
